<compile_context>
chip_gen: v7x
topology: tpu7x:2x2x1
jax: 0.10.0
libtpu: 0.0.40
codegen_flags: <defaults>
</compile_context>

<pallas_src>
import jax
import jax.numpy as jnp
from jax.experimental import pallas as pl
from jax.experimental.pallas import tpu as pltpu


def _round_up(x: int, m: int) -> int:
    return ((x + m - 1) // m) * m


def _meanpool_kernel(data_ref, mask_ref, out_ref):
    # data_ref: (TB, S, D), mask_ref: (TB, 1, S), out_ref: (TB, D)
    d = data_ref[...]
    m_f32 = mask_ref[...].astype(jnp.float32)          # (TB, 1, S)

    # Masked sum over S on the MXU: (TB, 1, S) @ (TB, S, D) -> (TB, 1, D),
    # accumulated in float32 regardless of the input dtype.
    num = jax.lax.dot_general(
        m_f32.astype(d.dtype), d,
        dimension_numbers=(((2,), (1,)), ((0,), (0,))),
        preferred_element_type=jnp.float32,
    )[:, 0, :]                                          # (TB, D), f32

    den = jnp.sum(m_f32, axis=2)                        # (TB, 1), f32 accumulation
    inv = pl.reciprocal(den, approx=True)               # EUP slot — effectively free
    out_ref[...] = (num * inv).astype(out_ref.dtype)


def _pick_block_b(B: int, S: int, D: int, itemsize: int) -> int:
    """Batch rows per grid step.

    Sized so the double-buffered working set (data + lane-major mask + output)
    stays inside a ~12 MiB block budget — comfortably under v5e's 16 MiB default
    scoped VMEM and v6e/v7x's 32 MiB (v7x physical VMEM is only 64 MiB) — while
    keeping the data tile in the multi-hundred-KiB..MiB range that amortizes the
    ~0.35 us per-step overhead.
    """
    data_row = S * D * itemsize                          # one batch row of data
    mask_row = 8 * _round_up(S, 128) * 4                 # (1, S) slice, (8,128)-padded
    out_row = _round_up(D, 128) * 4
    per_row = 2 * (data_row + mask_row) + 2 * out_row    # x2: double buffering
    budget = 12 * 1024 * 1024

    tb = max(1, budget // per_row)
    tb = min(tb, B)
    if tb < B:
        # Keep (TB, D) output stores sublane-dense (multiple of 8 rows).
        tb = min(B, max(8, (tb // 8) * 8))
        # TODO(synk): for very large S*D (one row >> 1 MiB) add an "arbitrary" S
        # grid axis with a float32 VMEM accumulator instead of forcing 8 rows.
    elif B >= 16:
        # Prefer >= 2 grid steps so v7x's two TensorCores both get work.
        half = (B + 1) // 2
        tb = min(tb, max(8, _round_up(half, 8)))
    return tb


def mean_pool(data: jax.Array, mask: jax.Array) -> jax.Array:
    """Masked mean pool over axis 1. data: (B, S, D), mask: (B, S, 1) -> (B, D)."""
    B, S, D = data.shape
    if mask.ndim == 3:
        assert mask.shape == (B, S, 1)
    else:
        assert mask.shape == (B, S)
    # Lane-major mask view (B, 1, S): pure layout glue, avoids the 128x lane
    # padding a (*, S, 1) VMEM block would incur.
    mask_l = mask.reshape(B, 1, S)

    tb = _pick_block_b(B, S, D, jnp.dtype(data.dtype).itemsize)
    grid = (pl.cdiv(B, tb),)

    return pl.pallas_call(
        _meanpool_kernel,
        out_shape=jax.ShapeDtypeStruct((B, D), data.dtype),
        grid_spec=pltpu.PrefetchScalarGridSpec(
            num_scalar_prefetch=0,
            grid=grid,
            in_specs=[
                pl.BlockSpec((tb, S, D), lambda b: (b, 0, 0)),
                pl.BlockSpec((tb, 1, S), lambda b: (b, 0, 0)),
            ],
            out_specs=pl.BlockSpec((tb, D), lambda b: (b, 0)),
        ),
        compiler_params=pltpu.CompilerParams(
            dimension_semantics=("parallel",),
            # Headroom above v5e's 16 MiB default scoped limit; still well under
            # v7x's 64 MiB physical VMEM.
            vmem_limit_bytes=48 * 1024 * 1024,
        ),
    )(data, mask_l)


def _reference(data, mask):
    num = jnp.sum(data * mask, axis=1, keepdims=True)
    den = jnp.sum(mask, axis=-2, keepdims=True)
    return (num / den)[:, 0, :]


if __name__ == "__main__":
    key = jax.random.PRNGKey(0)
    # Small but layout-representative: TB = B = 8 sublane-dense rows, D = 128 lanes.
    B, S, D = 8, 16, 128
    k1, k2 = jax.random.split(key)
    data = jax.random.normal(k1, (B, S, D), dtype=jnp.float32)
    # Binary mask over the sequence dim (keep at least one element per batch row).
    mask = (jax.random.uniform(k2, (B, S, 1)) > 0.3).astype(jnp.float32)
    mask = mask.at[:, 0, :].set(1.0)

    out = mean_pool(data, mask)
    jax.block_until_ready(out)

    ref = _reference(data, mask)
    assert out.shape == (B, D)
    # Slightly loosened tolerance: pl.reciprocal(approx=True) uses the EUP's
    # approximate reciprocal.
    assert jnp.allclose(out, ref, atol=3e-3, rtol=3e-3), float(
        jnp.max(jnp.abs(out - ref))
    )
    print("KERNEL_OK")
</pallas_src>

<mosaic_0001>
module attributes {stable_mosaic.version = 11 : i64} {
  func.func @_meanpool_kernel(%arg0: i32, %arg1: memref<8x16x128xf32, #tpu.memory_space<vmem>>, %arg2: memref<8x1x16xf32, #tpu.memory_space<vmem>>, %arg3: memref<8x128xf32, #tpu.memory_space<vmem>>) attributes {dimension_semantics = [#tpu.dimension_semantics<parallel>], iteration_bounds = array<i64: 1>, scalar_prefetch = 0 : i64, scratch_operands = 0 : i64, tpu.core_type = #tpu.core_type<tc>, window_params = [{transform_indices = @transform_0, window_bounds = array<i64: 8, 16, 128>}, {transform_indices = @transform_1, window_bounds = array<i64: 8, 1, 16>}, {transform_indices = @transform_2, window_bounds = array<i64: 8, 128>}]} {
    %c0 = arith.constant 0 : index
    %c0_0 = arith.constant 0 : index
    %c0_1 = arith.constant 0 : index
    %0 = vector.load %arg1[%c0, %c0_0, %c0_1] : memref<8x16x128xf32, #tpu.memory_space<vmem>>, vector<8x16x128xf32>
    %c0_2 = arith.constant 0 : index
    %c0_3 = arith.constant 0 : index
    %c0_4 = arith.constant 0 : index
    %1 = vector.load %arg2[%c0_2, %c0_3, %c0_4] : memref<8x1x16xf32, #tpu.memory_space<vmem>>, vector<8x1x16xf32>
    %cst = arith.constant dense<0.000000e+00> : vector<8x1x128xf32>
    %2 = tpu.matmul %1, %0, %cst {dimension_numbers = #tpu.dot_dimension_numbers<[2], [1], [1], [2], [0, 0, 0, 1, 1, 2], [0], [0]>} : vector<8x1x16xf32>, vector<8x16x128xf32>, vector<8x1x128xf32> -> vector<8x1x128xf32>
    %3 = vector.shape_cast %2 : vector<8x1x128xf32> to vector<8x128xf32>
    %cst_5 = arith.constant dense<0.000000e+00> : vector<8x1xf32>
    %4 = vector.multi_reduction <add>, %1, %cst_5 [2] : vector<8x1x16xf32> to vector<8x1xf32>
    %5 = tpu.reciprocal %4 {approx = true} : vector<8x1xf32> -> vector<8x1xf32>
    %6 = vector.broadcast %5 : vector<8x1xf32> to vector<8x128xf32>
    %7 = arith.mulf %3, %6 : vector<8x128xf32>
    %c0_6 = arith.constant 0 : index
    %c0_7 = arith.constant 0 : index
    %8 = vector.load %arg3[%c0_6, %c0_7] : memref<8x128xf32, #tpu.memory_space<vmem>>, vector<8x128xf32>
    tpu.vector_store %arg3[%c0_6, %c0_7], %7 {strides = array<i32>} : memref<8x128xf32, #tpu.memory_space<vmem>>, vector<8x128xf32>,
    return
  }
  func.func @transform_0(%arg0: i32) -> (i32, i32, i32) {
    %c0_i32 = arith.constant 0 : i32
    %c0_i32_0 = arith.constant 0 : i32
    %c0_i32_1 = arith.constant 0 : i32
    return %arg0, %c0_i32, %c0_i32_0 : i32, i32, i32
  }
  func.func @transform_1(%arg0: i32) -> (i32, i32, i32) {
    %c0_i32 = arith.constant 0 : i32
    %c0_i32_0 = arith.constant 0 : i32
    %c0_i32_1 = arith.constant 0 : i32
    return %arg0, %c0_i32, %c0_i32_0 : i32, i32, i32
  }
  func.func @transform_2(%arg0: i32) -> (i32, i32) {
    %c0_i32 = arith.constant 0 : i32
    %c0_i32_0 = arith.constant 0 : i32
    return %arg0, %c0_i32 : i32, i32
  }
}

</mosaic_0001>

<llo_original>
// kernel: tpu_custom_call.1
$region0: #{tpu_custom_call.1}
  #allocation0 [shape = 'u32[]', space=smem, size = 0x4, offset = 0x4, fixed_abs, tag = 'smem constant byte address 0x4 - core index']
  #allocation1 [shape = 'u32[144,128]{1,0:T(1,128)}', space=vmem, size = 0x12000, scoped, tag = 'internal scratch']
  %s0 = inlined_call_operand.hbm [shape: f32[8,16,128], index: 0, kind: input, shape index: {}]
  %s1 = inlined_call_operand.hbm [shape: f32[8,1,16], index: 1, kind: input, shape index: {}]
  %s2 = inlined_call_operand.hbm [shape: f32[8,128], index: 2, kind: output, shape index: {}]
  %s3 = sld [smem:[#allocation0]]
  $region26: #{tpu_custom_call.1} parent=0
    _
  %s5 = ssub.s32 1, %s3
  %s6 = scalar_select 0, %s5, %s3
  $region1: #{tpu_custom_call.1} parent=0
    #allocation2 [shape = 'u8[65536]{0}', space=vmem, size = 0x10000, scoped, tag = 'input window, operand 0, single buffered']
    #allocation3 [shape = 's32[1]{0}', space=sflag, size = 0x4, scoped, tag = 'scoped memory for tpu_custom_call.1']
    #allocation4 [shape = 's32[1]{0}', space=sflag, size = 0x4, scoped, tag = 'scoped memory for tpu_custom_call.1']
    #allocation5 [shape = 'u8[4096]{0}', space=vmem, size = 0x1000, scoped, tag = 'input window, operand 1, single buffered']
    #allocation6 [shape = 's32[1]{0}', space=sflag, size = 0x4, scoped, tag = 'scoped memory for tpu_custom_call.1']
    #allocation7 [shape = 'u8[4096]{0}', space=vmem, size = 0x1000, scoped, tag = 'output window, operand 0, single buffered']
    %7 = vsyncpa [#allocation3], 0
    %8 = vsyncpa [#allocation6], 0
    %9 = vsyncpa [#allocation4], 0
    // Predicated region
    $region2: #{tpu_custom_call.1} parent=1 // pred_check
      _
    $region3: #{tpu_custom_call.1} parent=1 // pred_check_branch
      %11 = sbr.rel (0) target = $region5
    $region4: #{tpu_custom_call.1} parent=1 // pred_region
      %s13 = ssub.s32 2048, 2048
      %14 = vsyncadd [#allocation3], %s13
      %s15 = sshll.u32 [#allocation2], 4
      %s16 = int_to_ptr.vmem [resolvable:$true] %s15
      %21 = dma.hbm_to_vmem [thread:$0]  %s0, 2048, %s16, [#allocation3], 128, 128, 8
    $region5: #{tpu_custom_call.1} parent=1 // pred_fallthru
      _
    // Predicated region
    $region6: #{tpu_custom_call.1} parent=1 // pred_check
      _
    $region7: #{tpu_custom_call.1} parent=1 // pred_check_branch
      %23 = sbr.rel (0) target = $region9
    $region8: #{tpu_custom_call.1} parent=1 // pred_region
      %s25 = ssub.s32 128, 128
      %26 = vsyncadd [#allocation6], %s25
      %s27 = sshll.u32 [#allocation5], 4
      %s28 = int_to_ptr.vmem [resolvable:$true] %s27
      %33 = dma.hbm_to_vmem [thread:$0]  %s1, 128, %s28, [#allocation6], 16, 16, 1
    $region9: #{tpu_custom_call.1} parent=1 // pred_fallthru
      _
    // Predicated region
    $region10: #{tpu_custom_call.1} parent=1 // pred_check
      _
    $region11: #{tpu_custom_call.1} parent=1 // pred_check_branch
      %35 = sbr.rel (0) target = $region13
    $region12: #{tpu_custom_call.1} parent=1 // pred_region
      %36 = dma.done [#allocation3], 2048
    $region13: #{tpu_custom_call.1} parent=1 // pred_fallthru
      _
    // Predicated region
    $region14: #{tpu_custom_call.1} parent=1 // pred_check
      _
    $region15: #{tpu_custom_call.1} parent=1 // pred_check_branch
      %38 = sbr.rel (0) target = $region17
    $region16: #{tpu_custom_call.1} parent=1 // pred_region
      %39 = dma.done [#allocation6], 128
    $region17: #{tpu_custom_call.1} parent=1 // pred_fallthru
      _
    %v40 = vld [vmem:[#allocation2] sm:$0xff]
    %v41 = vld [vmem:[#allocation2 + $0x8] sm:$0xff]
    %v42 = vld [vmem:[#allocation2 + $0x10] sm:$0xff]
    %v43 = vld [vmem:[#allocation2 + $0x18] sm:$0xff]
    %v44 = vld [vmem:[#allocation2 + $0x20] sm:$0xff]
    %v45 = vld [vmem:[#allocation2 + $0x28] sm:$0xff]
    %v46 = vld [vmem:[#allocation2 + $0x30] sm:$0xff]
    %v47 = vld [vmem:[#allocation2 + $0x38] sm:$0xff]
    %v48 = vld [vmem:[#allocation2 + $0x40] sm:$0xff]
    %v49 = vld [vmem:[#allocation2 + $0x48] sm:$0xff]
    %v50 = vld [vmem:[#allocation2 + $0x50] sm:$0xff]
    %v51 = vld [vmem:[#allocation2 + $0x58] sm:$0xff]
    %v52 = vld [vmem:[#allocation2 + $0x60] sm:$0xff]
    %v53 = vld [vmem:[#allocation2 + $0x68] sm:$0xff]
    %v54 = vld [vmem:[#allocation2 + $0x70] sm:$0xff]
    %v55 = vld [vmem:[#allocation2 + $0x78] sm:$0xff]
    %v56 = vld [vmem:[#allocation5] sm:$0x1]
    %v57 = vld [vmem:[#allocation5 + $0x1] sm:$0x1]
    %v58 = vld [vmem:[#allocation5 + $0x2] sm:$0x1]
    %v59 = vld [vmem:[#allocation5 + $0x3] sm:$0x1]
    %v60 = vld [vmem:[#allocation5 + $0x4] sm:$0x1]
    %v61 = vld [vmem:[#allocation5 + $0x5] sm:$0x1]
    %v62 = vld [vmem:[#allocation5 + $0x6] sm:$0x1]
    %v63 = vld [vmem:[#allocation5 + $0x7] sm:$0x1]
    %vm64 = vcmask 130048
    %v66 = vsel %vm64, %v56, 0
    %68 = vmatprep.subr.mxu0 0.0
    %69 = vmatpush1.msra.mxu0 %v40
    %70 = vmatprep.subr.mxu0 0.0
    %71 = vmatpush1.msra.mxu0 %v41
    %72 = vmatprep.subr.mxu0 0.0
    %73 = vmatpush1.msra.mxu0 0.0
    %74 = vmatprep.subr.mxu0 0.0
    %75 = vmatpush1.msra.mxu0 0.0
    %76 = vmatprep.subr.mxu0 0.0
    %77 = vmatpush1.msra.mxu0 0.0
    %78 = vmatprep.subr.mxu0 0.0
    %79 = vmatpush1.msra.mxu0 0.0
    %80 = vmatprep.subr.mxu0 0.0
    %81 = vmatpush1.msra.mxu0 0.0
    %82 = vmatprep.subr.mxu0 0.0
    %83 = vmatpush1.msra.mxu0 0.0
    %84 = vmatprep.subr.mxu0 0.0
    %85 = vmatpush1.msra.mxu0 0.0
    %86 = vmatprep.subr.mxu0 0.0
    %87 = vmatpush1.msra.mxu0 0.0
    %88 = vmatprep.subr.mxu0 0.0
    %89 = vmatpush1.msra.mxu0 0.0
    %90 = vmatprep.subr.mxu0 0.0
    %91 = vmatpush1.msra.mxu0 0.0
    %92 = vmatprep.subr.mxu0 0.0
    %93 = vmatpush1.msra.mxu0 0.0
    %94 = vmatprep.subr.mxu0 0.0
    %95 = vmatpush1.msra.mxu0 0.0
    %96 = vmatprep.subr.mxu0 0.0
    %97 = vmatpush1.msra.mxu0 0.0
    %98 = vmatprep.subr.mxu0 0.0
    %99 = vmatpush1.msra.mxu0 0.0
    %100 = vmatprep.subr.mxu0 0.0
    %101 = vmatpush1.msra.mxu0 0.0
    %102 = vmatprep.subr.mxu0 0.0
    %103 = vmatpush1.msra.mxu0 0.0
    %104 = vmatprep.subr.mxu0 0.0
    %105 = vmatpush1.msra.mxu0 0.0
    %106 = vmatprep.subr.mxu0 0.0
    %107 = vmatpush1.msra.mxu0 0.0
    %108 = vmatprep.subr.mxu0 0.0
    %109 = vmatpush1.msra.mxu0 0.0
    %110 = vmatprep.subr.mxu0 0.0
    %111 = vmatpush1.msra.mxu0 0.0
    %112 = vmatprep.subr.mxu0 0.0
    %113 = vmatpush1.msra.mxu0 0.0
    %114 = vmatprep.subr.mxu0 0.0
    %115 = vmatpush1.msra.mxu0 0.0
    %116 = vmatprep.subr.mxu0 0.0
    %117 = vmatpush1.msra.mxu0 0.0
    %118 = vmatprep.subr.mxu0 0.0
    %119 = vmatpush1.msra.mxu0 0.0
    %120 = vmatprep.subr.mxu0 0.0
    %121 = vmatpush1.msra.mxu0 0.0
    %122 = vmatprep.subr.mxu0 0.0
    %123 = vmatpush1.msra.mxu0 0.0
    %124 = vmatprep.subr.mxu0 0.0
    %125 = vmatpush1.msra.mxu0 0.0
    %126 = vmatprep.subr.mxu0 0.0
    %127 = vmatpush1.msra.mxu0 0.0
    %128 = vmatprep.subr.mxu0 0.0
    %129 = vmatpush1.msra.mxu0 0.0
    %130 = vmatprep.subr.mxu0 0.0
    %131 = vmatpush1.msra.mxu0 0.0
    %132 = vmatprep.mubr.f32.mxu0 0.0
    %133 = vmatmul.mubr.f32.gmra.mrb[0].mxu0 %v66
    %v134 = vpop.f32.mrb[0].mxu0
    %v135 = vadd.f32 0.0, %v134
    %v136 = vpop.f32.mrb[0].mxu0
    %137 = vdwg.mxu0
    %v139 = vsel %vm64, %v57, 0
    %141 = vmatprep.subr.mxu0 0.0
    %142 = vmatpush1.msra.mxu0 %v42
    %143 = vmatprep.subr.mxu0 0.0
    %144 = vmatpush1.msra.mxu0 %v43
    %145 = vmatprep.subr.mxu0 0.0
    %146 = vmatpush1.msra.mxu0 0.0
    %147 = vmatprep.subr.mxu0 0.0
    %148 = vmatpush1.msra.mxu0 0.0
    %149 = vmatprep.subr.mxu0 0.0
    %150 = vmatpush1.msra.mxu0 0.0
    %151 = vmatprep.subr.mxu0 0.0
    %152 = vmatpush1.msra.mxu0 0.0
    %153 = vmatprep.subr.mxu0 0.0
    %154 = vmatpush1.msra.mxu0 0.0
    %155 = vmatprep.subr.mxu0 0.0
    %156 = vmatpush1.msra.mxu0 0.0
    %157 = vmatprep.subr.mxu0 0.0
    %158 = vmatpush1.msra.mxu0 0.0
    %159 = vmatprep.subr.mxu0 0.0
    %160 = vmatpush1.msra.mxu0 0.0
    %161 = vmatprep.subr.mxu0 0.0
    %162 = vmatpush1.msra.mxu0 0.0
    %163 = vmatprep.subr.mxu0 0.0
    %164 = vmatpush1.msra.mxu0 0.0
    %165 = vmatprep.subr.mxu0 0.0
    %166 = vmatpush1.msra.mxu0 0.0
    %167 = vmatprep.subr.mxu0 0.0
    %168 = vmatpush1.msra.mxu0 0.0
    %169 = vmatprep.subr.mxu0 0.0
    %170 = vmatpush1.msra.mxu0 0.0
    %171 = vmatprep.subr.mxu0 0.0
    %172 = vmatpush1.msra.mxu0 0.0
    %173 = vmatprep.subr.mxu0 0.0
    %174 = vmatpush1.msra.mxu0 0.0
    %175 = vmatprep.subr.mxu0 0.0
    %176 = vmatpush1.msra.mxu0 0.0
    %177 = vmatprep.subr.mxu0 0.0
    %178 = vmatpush1.msra.mxu0 0.0
    %179 = vmatprep.subr.mxu0 0.0
    %180 = vmatpush1.msra.mxu0 0.0
    %181 = vmatprep.subr.mxu0 0.0
    %182 = vmatpush1.msra.mxu0 0.0
    %183 = vmatprep.subr.mxu0 0.0
    %184 = vmatpush1.msra.mxu0 0.0
    %185 = vmatprep.subr.mxu0 0.0
    %186 = vmatpush1.msra.mxu0 0.0
    %187 = vmatprep.subr.mxu0 0.0
    %188 = vmatpush1.msra.mxu0 0.0
    %189 = vmatprep.subr.mxu0 0.0
    %190 = vmatpush1.msra.mxu0 0.0
    %191 = vmatprep.subr.mxu0 0.0
    %192 = vmatpush1.msra.mxu0 0.0
    %193 = vmatprep.subr.mxu0 0.0
    %194 = vmatpush1.msra.mxu0 0.0
    %195 = vmatprep.subr.mxu0 0.0
    %196 = vmatpush1.msra.mxu0 0.0
    %197 = vmatprep.subr.mxu0 0.0
    %198 = vmatpush1.msra.mxu0 0.0
    %199 = vmatprep.subr.mxu0 0.0
    %200 = vmatpush1.msra.mxu0 0.0
    %201 = vmatprep.subr.mxu0 0.0
    %202 = vmatpush1.msra.mxu0 0.0
    %203 = vmatprep.subr.mxu0 0.0
    %204 = vmatpush1.msra.mxu0 0.0
    %205 = vmatprep.mubr.f32.mxu0 0.0
    %206 = vmatmul.mubr.f32.gmra.mrb[0].mxu0 %v139
    %v207 = vpop.f32.mrb[0].mxu0
    %v208 = vadd.f32 0.0, %v207
    %v209 = vpop.f32.mrb[0].mxu0
    %210 = vdwg.mxu0
    %v212 = vsel %vm64, %v58, 0
    %214 = vmatprep.subr.mxu0 0.0
    %215 = vmatpush1.msra.mxu0 %v44
    %216 = vmatprep.subr.mxu0 0.0
    %217 = vmatpush1.msra.mxu0 %v45
    %218 = vmatprep.subr.mxu0 0.0
    %219 = vmatpush1.msra.mxu0 0.0
    %220 = vmatprep.subr.mxu0 0.0
    %221 = vmatpush1.msra.mxu0 0.0
    %222 = vmatprep.subr.mxu0 0.0
    %223 = vmatpush1.msra.mxu0 0.0
    %224 = vmatprep.subr.mxu0 0.0
    %225 = vmatpush1.msra.mxu0 0.0
    %226 = vmatprep.subr.mxu0 0.0
    %227 = vmatpush1.msra.mxu0 0.0
    %228 = vmatprep.subr.mxu0 0.0
    %229 = vmatpush1.msra.mxu0 0.0
    %230 = vmatprep.subr.mxu0 0.0
    %231 = vmatpush1.msra.mxu0 0.0
    %232 = vmatprep.subr.mxu0 0.0
    %233 = vmatpush1.msra.mxu0 0.0
    %234 = vmatprep.subr.mxu0 0.0
    %235 = vmatpush1.msra.mxu0 0.0
    %236 = vmatprep.subr.mxu0 0.0
    %237 = vmatpush1.msra.mxu0 0.0
    %238 = vmatprep.subr.mxu0 0.0
    %239 = vmatpush1.msra.mxu0 0.0
    %240 = vmatprep.subr.mxu0 0.0
    %241 = vmatpush1.msra.mxu0 0.0
    %242 = vmatprep.subr.mxu0 0.0
    %243 = vmatpush1.msra.mxu0 0.0
    %244 = vmatprep.subr.mxu0 0.0
    %245 = vmatpush1.msra.mxu0 0.0
    %246 = vmatprep.subr.mxu0 0.0
    %247 = vmatpush1.msra.mxu0 0.0
    %248 = vmatprep.subr.mxu0 0.0
    %249 = vmatpush1.msra.mxu0 0.0
    %250 = vmatprep.subr.mxu0 0.0
    %251 = vmatpush1.msra.mxu0 0.0
    %252 = vmatprep.subr.mxu0 0.0
    %253 = vmatpush1.msra.mxu0 0.0
    %254 = vmatprep.subr.mxu0 0.0
    %255 = vmatpush1.msra.mxu0 0.0
    %256 = vmatprep.subr.mxu0 0.0
    %257 = vmatpush1.msra.mxu0 0.0
    %258 = vmatprep.subr.mxu0 0.0
    %259 = vmatpush1.msra.mxu0 0.0
    %260 = vmatprep.subr.mxu0 0.0
    %261 = vmatpush1.msra.mxu0 0.0
    %262 = vmatprep.subr.mxu0 0.0
    %263 = vmatpush1.msra.mxu0 0.0
    %264 = vmatprep.subr.mxu0 0.0
    %265 = vmatpush1.msra.mxu0 0.0
    %266 = vmatprep.subr.mxu0 0.0
    %267 = vmatpush1.msra.mxu0 0.0
    %268 = vmatprep.subr.mxu0 0.0
    %269 = vmatpush1.msra.mxu0 0.0
    %270 = vmatprep.subr.mxu0 0.0
    %271 = vmatpush1.msra.mxu0 0.0
    %272 = vmatprep.subr.mxu0 0.0
    %273 = vmatpush1.msra.mxu0 0.0
    %274 = vmatprep.subr.mxu0 0.0
    %275 = vmatpush1.msra.mxu0 0.0
    %276 = vmatprep.subr.mxu0 0.0
    %277 = vmatpush1.msra.mxu0 0.0
    %278 = vmatprep.mubr.f32.mxu0 0.0
    %279 = vmatmul.mubr.f32.gmra.mrb[0].mxu0 %v212
    %v280 = vpop.f32.mrb[0].mxu0
    %v281 = vadd.f32 0.0, %v280
    %v282 = vpop.f32.mrb[0].mxu0
    %283 = vdwg.mxu0
    %v285 = vsel %vm64, %v59, 0
    %287 = vmatprep.subr.mxu0 0.0
    %288 = vmatpush1.msra.mxu0 %v46
    %289 = vmatprep.subr.mxu0 0.0
    %290 = vmatpush1.msra.mxu0 %v47
    %291 = vmatprep.subr.mxu0 0.0
    %292 = vmatpush1.msra.mxu0 0.0
    %293 = vmatprep.subr.mxu0 0.0
    %294 = vmatpush1.msra.mxu0 0.0
    %295 = vmatprep.subr.mxu0 0.0
    %296 = vmatpush1.msra.mxu0 0.0
    %297 = vmatprep.subr.mxu0 0.0
    %298 = vmatpush1.msra.mxu0 0.0
    %299 = vmatprep.subr.mxu0 0.0
    %300 = vmatpush1.msra.mxu0 0.0
    %301 = vmatprep.subr.mxu0 0.0
    %302 = vmatpush1.msra.mxu0 0.0
    %303 = vmatprep.subr.mxu0 0.0
    %304 = vmatpush1.msra.mxu0 0.0
    %305 = vmatprep.subr.mxu0 0.0
    %306 = vmatpush1.msra.mxu0 0.0
    %307 = vmatprep.subr.mxu0 0.0
    %308 = vmatpush1.msra.mxu0 0.0
    %309 = vmatprep.subr.mxu0 0.0
    %310 = vmatpush1.msra.mxu0 0.0
    %311 = vmatprep.subr.mxu0 0.0
    %312 = vmatpush1.msra.mxu0 0.0
    %313 = vmatprep.subr.mxu0 0.0
    %314 = vmatpush1.msra.mxu0 0.0
    %315 = vmatprep.subr.mxu0 0.0
    %316 = vmatpush1.msra.mxu0 0.0
    %317 = vmatprep.subr.mxu0 0.0
    %318 = vmatpush1.msra.mxu0 0.0
    %319 = vmatprep.subr.mxu0 0.0
    %320 = vmatpush1.msra.mxu0 0.0
    %321 = vmatprep.subr.mxu0 0.0
    %322 = vmatpush1.msra.mxu0 0.0
    %323 = vmatprep.subr.mxu0 0.0
    %324 = vmatpush1.msra.mxu0 0.0
    %325 = vmatprep.subr.mxu0 0.0
    %326 = vmatpush1.msra.mxu0 0.0
    %327 = vmatprep.subr.mxu0 0.0
    %328 = vmatpush1.msra.mxu0 0.0
    %329 = vmatprep.subr.mxu0 0.0
    %330 = vmatpush1.msra.mxu0 0.0
    %331 = vmatprep.subr.mxu0 0.0
    %332 = vmatpush1.msra.mxu0 0.0
    %333 = vmatprep.subr.mxu0 0.0
    %334 = vmatpush1.msra.mxu0 0.0
    %335 = vmatprep.subr.mxu0 0.0
    %336 = vmatpush1.msra.mxu0 0.0
    %337 = vmatprep.subr.mxu0 0.0
    %338 = vmatpush1.msra.mxu0 0.0
    %339 = vmatprep.subr.mxu0 0.0
    %340 = vmatpush1.msra.mxu0 0.0
    %341 = vmatprep.subr.mxu0 0.0
    %342 = vmatpush1.msra.mxu0 0.0
    %343 = vmatprep.subr.mxu0 0.0
    %344 = vmatpush1.msra.mxu0 0.0
    %345 = vmatprep.subr.mxu0 0.0
    %346 = vmatpush1.msra.mxu0 0.0
    %347 = vmatprep.subr.mxu0 0.0
    %348 = vmatpush1.msra.mxu0 0.0
    %349 = vmatprep.subr.mxu0 0.0
    %350 = vmatpush1.msra.mxu0 0.0
    %351 = vmatprep.mubr.f32.mxu0 0.0
    %352 = vmatmul.mubr.f32.gmra.mrb[0].mxu0 %v285
    %v353 = vpop.f32.mrb[0].mxu0
    %v354 = vadd.f32 0.0, %v353
    %v355 = vpop.f32.mrb[0].mxu0
    %356 = vdwg.mxu0
    %v358 = vsel %vm64, %v60, 0
    %360 = vmatprep.subr.mxu0 0.0
    %361 = vmatpush1.msra.mxu0 %v48
    %362 = vmatprep.subr.mxu0 0.0
    %363 = vmatpush1.msra.mxu0 %v49
    %364 = vmatprep.subr.mxu0 0.0
    %365 = vmatpush1.msra.mxu0 0.0
    %366 = vmatprep.subr.mxu0 0.0
    %367 = vmatpush1.msra.mxu0 0.0
    %368 = vmatprep.subr.mxu0 0.0
    %369 = vmatpush1.msra.mxu0 0.0
    %370 = vmatprep.subr.mxu0 0.0
    %371 = vmatpush1.msra.mxu0 0.0
    %372 = vmatprep.subr.mxu0 0.0
    %373 = vmatpush1.msra.mxu0 0.0
    %374 = vmatprep.subr.mxu0 0.0
    %375 = vmatpush1.msra.mxu0 0.0
    %376 = vmatprep.subr.mxu0 0.0
    %377 = vmatpush1.msra.mxu0 0.0
    %378 = vmatprep.subr.mxu0 0.0
    %379 = vmatpush1.msra.mxu0 0.0
    %380 = vmatprep.subr.mxu0 0.0
    %381 = vmatpush1.msra.mxu0 0.0
    %382 = vmatprep.subr.mxu0 0.0
    %383 = vmatpush1.msra.mxu0 0.0
    %384 = vmatprep.subr.mxu0 0.0
    %385 = vmatpush1.msra.mxu0 0.0
    %386 = vmatprep.subr.mxu0 0.0
    %387 = vmatpush1.msra.mxu0 0.0
    %388 = vmatprep.subr.mxu0 0.0
    %389 = vmatpush1.msra.mxu0 0.0
    %390 = vmatprep.subr.mxu0 0.0
    %391 = vmatpush1.msra.mxu0 0.0
    %392 = vmatprep.subr.mxu0 0.0
    %393 = vmatpush1.msra.mxu0 0.0
    %394 = vmatprep.subr.mxu0 0.0
    %395 = vmatpush1.msra.mxu0 0.0
    %396 = vmatprep.subr.mxu0 0.0
    %397 = vmatpush1.msra.mxu0 0.0
    %398 = vmatprep.subr.mxu0 0.0
    %399 = vmatpush1.msra.mxu0 0.0
    %400 = vmatprep.subr.mxu0 0.0
    %401 = vmatpush1.msra.mxu0 0.0
    %402 = vmatprep.subr.mxu0 0.0
    %403 = vmatpush1.msra.mxu0 0.0
    %404 = vmatprep.subr.mxu0 0.0
    %405 = vmatpush1.msra.mxu0 0.0
    %406 = vmatprep.subr.mxu0 0.0
    %407 = vmatpush1.msra.mxu0 0.0
    %408 = vmatprep.subr.mxu0 0.0
    %409 = vmatpush1.msra.mxu0 0.0
    %410 = vmatprep.subr.mxu0 0.0
    %411 = vmatpush1.msra.mxu0 0.0
    %412 = vmatprep.subr.mxu0 0.0
    %413 = vmatpush1.msra.mxu0 0.0
    %414 = vmatprep.subr.mxu0 0.0
    %415 = vmatpush1.msra.mxu0 0.0
    %416 = vmatprep.subr.mxu0 0.0
    %417 = vmatpush1.msra.mxu0 0.0
    %418 = vmatprep.subr.mxu0 0.0
    %419 = vmatpush1.msra.mxu0 0.0
    %420 = vmatprep.subr.mxu0 0.0
    %421 = vmatpush1.msra.mxu0 0.0
    %422 = vmatprep.subr.mxu0 0.0
    %423 = vmatpush1.msra.mxu0 0.0
    %424 = vmatprep.mubr.f32.mxu0 0.0
    %425 = vmatmul.mubr.f32.gmra.mrb[0].mxu0 %v358
    %v426 = vpop.f32.mrb[0].mxu0
    %v427 = vadd.f32 0.0, %v426
    %v428 = vpop.f32.mrb[0].mxu0
    %429 = vdwg.mxu0
    %v431 = vsel %vm64, %v61, 0
    %433 = vmatprep.subr.mxu0 0.0
    %434 = vmatpush1.msra.mxu0 %v50
    %435 = vmatprep.subr.mxu0 0.0
    %436 = vmatpush1.msra.mxu0 %v51
    %437 = vmatprep.subr.mxu0 0.0
    %438 = vmatpush1.msra.mxu0 0.0
    %439 = vmatprep.subr.mxu0 0.0
    %440 = vmatpush1.msra.mxu0 0.0
    %441 = vmatprep.subr.mxu0 0.0
    %442 = vmatpush1.msra.mxu0 0.0
    %443 = vmatprep.subr.mxu0 0.0
    %444 = vmatpush1.msra.mxu0 0.0
    %445 = vmatprep.subr.mxu0 0.0
    %446 = vmatpush1.msra.mxu0 0.0
    %447 = vmatprep.subr.mxu0 0.0
    %448 = vmatpush1.msra.mxu0 0.0
    %449 = vmatprep.subr.mxu0 0.0
    %450 = vmatpush1.msra.mxu0 0.0
    %451 = vmatprep.subr.mxu0 0.0
    %452 = vmatpush1.msra.mxu0 0.0
    %453 = vmatprep.subr.mxu0 0.0
    %454 = vmatpush1.msra.mxu0 0.0
    %455 = vmatprep.subr.mxu0 0.0
    %456 = vmatpush1.msra.mxu0 0.0
    %457 = vmatprep.subr.mxu0 0.0
    %458 = vmatpush1.msra.mxu0 0.0
    %459 = vmatprep.subr.mxu0 0.0
    %460 = vmatpush1.msra.mxu0 0.0
    %461 = vmatprep.subr.mxu0 0.0
    %462 = vmatpush1.msra.mxu0 0.0
    %463 = vmatprep.subr.mxu0 0.0
    %464 = vmatpush1.msra.mxu0 0.0
    %465 = vmatprep.subr.mxu0 0.0
    %466 = vmatpush1.msra.mxu0 0.0
    %467 = vmatprep.subr.mxu0 0.0
    %468 = vmatpush1.msra.mxu0 0.0
    %469 = vmatprep.subr.mxu0 0.0
    %470 = vmatpush1.msra.mxu0 0.0
    %471 = vmatprep.subr.mxu0 0.0
    %472 = vmatpush1.msra.mxu0 0.0
    %473 = vmatprep.subr.mxu0 0.0
    %474 = vmatpush1.msra.mxu0 0.0
    %475 = vmatprep.subr.mxu0 0.0
    %476 = vmatpush1.msra.mxu0 0.0
    %477 = vmatprep.subr.mxu0 0.0
    %478 = vmatpush1.msra.mxu0 0.0
    %479 = vmatprep.subr.mxu0 0.0
    %480 = vmatpush1.msra.mxu0 0.0
    %481 = vmatprep.subr.mxu0 0.0
    %482 = vmatpush1.msra.mxu0 0.0
    %483 = vmatprep.subr.mxu0 0.0
    %484 = vmatpush1.msra.mxu0 0.0
    %485 = vmatprep.subr.mxu0 0.0
    %486 = vmatpush1.msra.mxu0 0.0
    %487 = vmatprep.subr.mxu0 0.0
    %488 = vmatpush1.msra.mxu0 0.0
    %489 = vmatprep.subr.mxu0 0.0
    %490 = vmatpush1.msra.mxu0 0.0
    %491 = vmatprep.subr.mxu0 0.0
    %492 = vmatpush1.msra.mxu0 0.0
    %493 = vmatprep.subr.mxu0 0.0
    %494 = vmatpush1.msra.mxu0 0.0
    %495 = vmatprep.subr.mxu0 0.0
    %496 = vmatpush1.msra.mxu0 0.0
    %497 = vmatprep.mubr.f32.mxu0 0.0
    %498 = vmatmul.mubr.f32.gmra.mrb[0].mxu0 %v431
    %v499 = vpop.f32.mrb[0].mxu0
    %v500 = vadd.f32 0.0, %v499
    %v501 = vpop.f32.mrb[0].mxu0
    %502 = vdwg.mxu0
    %v504 = vsel %vm64, %v62, 0
    %506 = vmatprep.subr.mxu0 0.0
    %507 = vmatpush1.msra.mxu0 %v52
    %508 = vmatprep.subr.mxu0 0.0
    %509 = vmatpush1.msra.mxu0 %v53
    %510 = vmatprep.subr.mxu0 0.0
    %511 = vmatpush1.msra.mxu0 0.0
    %512 = vmatprep.subr.mxu0 0.0
    %513 = vmatpush1.msra.mxu0 0.0
    %514 = vmatprep.subr.mxu0 0.0
    %515 = vmatpush1.msra.mxu0 0.0
    %516 = vmatprep.subr.mxu0 0.0
    %517 = vmatpush1.msra.mxu0 0.0
    %518 = vmatprep.subr.mxu0 0.0
    %519 = vmatpush1.msra.mxu0 0.0
    %520 = vmatprep.subr.mxu0 0.0
    %521 = vmatpush1.msra.mxu0 0.0
    %522 = vmatprep.subr.mxu0 0.0
    %523 = vmatpush1.msra.mxu0 0.0
    %524 = vmatprep.subr.mxu0 0.0
    %525 = vmatpush1.msra.mxu0 0.0
    %526 = vmatprep.subr.mxu0 0.0
    %527 = vmatpush1.msra.mxu0 0.0
    %528 = vmatprep.subr.mxu0 0.0
    %529 = vmatpush1.msra.mxu0 0.0
    %530 = vmatprep.subr.mxu0 0.0
    %531 = vmatpush1.msra.mxu0 0.0
    %532 = vmatprep.subr.mxu0 0.0
    %533 = vmatpush1.msra.mxu0 0.0
    %534 = vmatprep.subr.mxu0 0.0
    %535 = vmatpush1.msra.mxu0 0.0
    %536 = vmatprep.subr.mxu0 0.0
    %537 = vmatpush1.msra.mxu0 0.0
    %538 = vmatprep.subr.mxu0 0.0
    %539 = vmatpush1.msra.mxu0 0.0
    %540 = vmatprep.subr.mxu0 0.0
    %541 = vmatpush1.msra.mxu0 0.0
    %542 = vmatprep.subr.mxu0 0.0
    %543 = vmatpush1.msra.mxu0 0.0
    %544 = vmatprep.subr.mxu0 0.0
    %545 = vmatpush1.msra.mxu0 0.0
    %546 = vmatprep.subr.mxu0 0.0
    %547 = vmatpush1.msra.mxu0 0.0
    %548 = vmatprep.subr.mxu0 0.0
    %549 = vmatpush1.msra.mxu0 0.0
    %550 = vmatprep.subr.mxu0 0.0
    %551 = vmatpush1.msra.mxu0 0.0
    %552 = vmatprep.subr.mxu0 0.0
    %553 = vmatpush1.msra.mxu0 0.0
    %554 = vmatprep.subr.mxu0 0.0
    %555 = vmatpush1.msra.mxu0 0.0
    %556 = vmatprep.subr.mxu0 0.0
    %557 = vmatpush1.msra.mxu0 0.0
    %558 = vmatprep.subr.mxu0 0.0
    %559 = vmatpush1.msra.mxu0 0.0
    %560 = vmatprep.subr.mxu0 0.0
    %561 = vmatpush1.msra.mxu0 0.0
    %562 = vmatprep.subr.mxu0 0.0
    %563 = vmatpush1.msra.mxu0 0.0
    %564 = vmatprep.subr.mxu0 0.0
    %565 = vmatpush1.msra.mxu0 0.0
    %566 = vmatprep.subr.mxu0 0.0
    %567 = vmatpush1.msra.mxu0 0.0
    %568 = vmatprep.subr.mxu0 0.0
    %569 = vmatpush1.msra.mxu0 0.0
    %570 = vmatprep.mubr.f32.mxu0 0.0
    %571 = vmatmul.mubr.f32.gmra.mrb[0].mxu0 %v504
    %v572 = vpop.f32.mrb[0].mxu0
    %v573 = vadd.f32 0.0, %v572
    %v574 = vpop.f32.mrb[0].mxu0
    %575 = vdwg.mxu0
    %v577 = vsel %vm64, %v63, 0
    %579 = vmatprep.subr.mxu0 0.0
    %580 = vmatpush1.msra.mxu0 %v54
    %581 = vmatprep.subr.mxu0 0.0
    %582 = vmatpush1.msra.mxu0 %v55
    %583 = vmatprep.subr.mxu0 0.0
    %584 = vmatpush1.msra.mxu0 0.0
    %585 = vmatprep.subr.mxu0 0.0
    %586 = vmatpush1.msra.mxu0 0.0
    %587 = vmatprep.subr.mxu0 0.0
    %588 = vmatpush1.msra.mxu0 0.0
    %589 = vmatprep.subr.mxu0 0.0
    %590 = vmatpush1.msra.mxu0 0.0
    %591 = vmatprep.subr.mxu0 0.0
    %592 = vmatpush1.msra.mxu0 0.0
    %593 = vmatprep.subr.mxu0 0.0
    %594 = vmatpush1.msra.mxu0 0.0
    %595 = vmatprep.subr.mxu0 0.0
    %596 = vmatpush1.msra.mxu0 0.0
    %597 = vmatprep.subr.mxu0 0.0
    %598 = vmatpush1.msra.mxu0 0.0
    %599 = vmatprep.subr.mxu0 0.0
    %600 = vmatpush1.msra.mxu0 0.0
    %601 = vmatprep.subr.mxu0 0.0
    %602 = vmatpush1.msra.mxu0 0.0
    %603 = vmatprep.subr.mxu0 0.0
    %604 = vmatpush1.msra.mxu0 0.0
    %605 = vmatprep.subr.mxu0 0.0
    %606 = vmatpush1.msra.mxu0 0.0
    %607 = vmatprep.subr.mxu0 0.0
    %608 = vmatpush1.msra.mxu0 0.0
    %609 = vmatprep.subr.mxu0 0.0
    %610 = vmatpush1.msra.mxu0 0.0
    %611 = vmatprep.subr.mxu0 0.0
    %612 = vmatpush1.msra.mxu0 0.0
    %613 = vmatprep.subr.mxu0 0.0
    %614 = vmatpush1.msra.mxu0 0.0
    %615 = vmatprep.subr.mxu0 0.0
    %616 = vmatpush1.msra.mxu0 0.0
    %617 = vmatprep.subr.mxu0 0.0
    %618 = vmatpush1.msra.mxu0 0.0
    %619 = vmatprep.subr.mxu0 0.0
    %620 = vmatpush1.msra.mxu0 0.0
    %621 = vmatprep.subr.mxu0 0.0
    %622 = vmatpush1.msra.mxu0 0.0
    %623 = vmatprep.subr.mxu0 0.0
    %624 = vmatpush1.msra.mxu0 0.0
    %625 = vmatprep.subr.mxu0 0.0
    %626 = vmatpush1.msra.mxu0 0.0
    %627 = vmatprep.subr.mxu0 0.0
    %628 = vmatpush1.msra.mxu0 0.0
    %629 = vmatprep.subr.mxu0 0.0
    %630 = vmatpush1.msra.mxu0 0.0
    %631 = vmatprep.subr.mxu0 0.0
    %632 = vmatpush1.msra.mxu0 0.0
    %633 = vmatprep.subr.mxu0 0.0
    %634 = vmatpush1.msra.mxu0 0.0
    %635 = vmatprep.subr.mxu0 0.0
    %636 = vmatpush1.msra.mxu0 0.0
    %637 = vmatprep.subr.mxu0 0.0
    %638 = vmatpush1.msra.mxu0 0.0
    %639 = vmatprep.subr.mxu0 0.0
    %640 = vmatpush1.msra.mxu0 0.0
    %641 = vmatprep.subr.mxu0 0.0
    %642 = vmatpush1.msra.mxu0 0.0
    %643 = vmatprep.mubr.f32.mxu0 0.0
    %644 = vmatmul.mubr.f32.gmra.mrb[0].mxu0 %v577
    %v645 = vpop.f32.mrb[0].mxu0
    %v646 = vadd.f32 0.0, %v645
    %v647 = vpop.f32.mrb[0].mxu0
    %648 = vdwg.mxu0
    %vm649 = vcmask 122880
    %v650 = vsel %vm649, %v56, 0.0
    %651 = vadd.xlane.f32.xlu0 %v650
    %v652 = vpop.xlane.xlu0 %651
    %v653 = vsel %vm649, %v57, 0.0
    %654 = vadd.xlane.f32.xlu0 %v653
    %v655 = vpop.xlane.xlu0 %654
    %v656 = vsel %vm649, %v58, 0.0
    %657 = vadd.xlane.f32.xlu0 %v656
    %v658 = vpop.xlane.xlu0 %657
    %v659 = vsel %vm649, %v59, 0.0
    %660 = vadd.xlane.f32.xlu0 %v659
    %v661 = vpop.xlane.xlu0 %660
    %v662 = vsel %vm649, %v60, 0.0
    %663 = vadd.xlane.f32.xlu0 %v662
    %v664 = vpop.xlane.xlu0 %663
    %v665 = vsel %vm649, %v61, 0.0
    %666 = vadd.xlane.f32.xlu0 %v665
    %v667 = vpop.xlane.xlu0 %666
    %v668 = vsel %vm649, %v62, 0.0
    %669 = vadd.xlane.f32.xlu0 %v668
    %v670 = vpop.xlane.xlu0 %669
    %v671 = vsel %vm649, %v63, 0.0
    %672 = vadd.xlane.f32.xlu0 %v671
    %v673 = vpop.xlane.xlu0 %672
    %v674 = vrcp.pop %v652
    %v675 = vrcp.pop %v655
    %v676 = vrcp.pop %v658
    %v677 = vrcp.pop %v661
    %v678 = vrcp.pop %v664
    %v679 = vrcp.pop %v667
    %v680 = vrcp.pop %v670
    %v681 = vrcp.pop %v673
    %v682 = vlaneseq
    %v683 = vshrl.u32 %v682, 7
    %v684 = vsub.s32 0, %v683
    %v685 = vrot.slane %v674, %v684
    %v686 = vlaneseq
    %v687 = vshrl.u32 %v686, 7
    %v688 = vsub.s32 0, %v687
    %v689 = vrot.slane %v675, %v688
    %v690 = vlaneseq
    %v691 = vshrl.u32 %v690, 7
    %v692 = vsub.s32 0, %v691
    %v693 = vrot.slane %v676, %v692
    %v694 = vlaneseq
    %v695 = vshrl.u32 %v694, 7
    %v696 = vsub.s32 0, %v695
    %v697 = vrot.slane %v677, %v696
    %v698 = vlaneseq
    %v699 = vshrl.u32 %v698, 7
    %v700 = vsub.s32 0, %v699
    %v701 = vrot.slane %v678, %v700
    %v702 = vlaneseq
    %v703 = vshrl.u32 %v702, 7
    %v704 = vsub.s32 0, %v703
    %v705 = vrot.slane %v679, %v704
    %v706 = vlaneseq
    %v707 = vshrl.u32 %v706, 7
    %v708 = vsub.s32 0, %v707
    %v709 = vrot.slane %v680, %v708
    %v710 = vlaneseq
    %v711 = vshrl.u32 %v710, 7
    %v712 = vsub.s32 0, %v711
    %v713 = vrot.slane %v681, %v712
    %v714 = vmul.f32 %v135, %v685
    %v715 = vmul.f32 %v208, %v689
    %v716 = vmul.f32 %v281, %v693
    %v717 = vmul.f32 %v354, %v697
    %v718 = vmul.f32 %v427, %v701
    %v719 = vmul.f32 %v500, %v705
    %v720 = vmul.f32 %v573, %v709
    %v721 = vmul.f32 %v646, %v713
    %v730 = vrot.slane %v715, 7
    %vm731 = vcmask 1041409
    %v732 = vsel %vm731, %v730, %v714
    %v733 = vrot.slane %v716, 6
    %vm734 = vcmask 1042434
    %v735 = vsel %vm734, %v733, %v732
    %v736 = vrot.slane %v717, 5
    %vm737 = vcmask 1043459
    %v738 = vsel %vm737, %v736, %v735
    %v739 = vrot.slane %v718, 4
    %vm740 = vcmask 1044484
    %v741 = vsel %vm740, %v739, %v738
    %v742 = vrot.slane %v719, 3
    %vm743 = vcmask 1045509
    %v744 = vsel %vm743, %v742, %v741
    %v745 = vrot.slane %v720, 2
    %vm746 = vcmask 1046534
    %v747 = vsel %vm746, %v745, %v744
    %v748 = vrot.slane %v721, 1
    %vm749 = vcmask 1047559
    %v750 = vsel %vm749, %v748, %v747
    %752 = vst [vmem:[#allocation7] sm:$0xff] %v750
    // Predicated region
    $region18: #{tpu_custom_call.1} parent=1 // pred_check
      _
    $region19: #{tpu_custom_call.1} parent=1 // pred_check_branch
      %754 = sbr.rel (0) target = $region21
    $region20: #{tpu_custom_call.1} parent=1 // pred_region
      %s756 = ssub.s32 128, 128
      %757 = vsyncadd [#allocation4], %s756
      %s759 = sshll.u32 [#allocation7], 4
      %s760 = int_to_ptr.vmem [resolvable:$true] %s759
      %762 = dma.vmem_to_hbm [thread:$0]  %s760, 128, %s2, [#allocation4]
    $region21: #{tpu_custom_call.1} parent=1 // pred_fallthru
      _
    // Predicated region
    $region22: #{tpu_custom_call.1} parent=1 // pred_check
      _
    $region23: #{tpu_custom_call.1} parent=1 // pred_check_branch
      %764 = sbr.rel (0) target = $region25
    $region24: #{tpu_custom_call.1} parent=1 // pred_region
      %765 = dma.done [#allocation4], 128
    $region25: #{tpu_custom_call.1} parent=1 // pred_fallthru
      _
    %766 = vsyncpa [#allocation3], 1
    %767 = vsyncpa [#allocation6], 1
    %768 = vsyncpa [#allocation4], 1

</llo_original>
